<compile_context>
chip_gen: v6e
topology: v6e:2x2x1
jax: 0.10.0
libtpu: 0.0.40
codegen_flags: <defaults>
</compile_context>

<pallas_src>
import numpy as np
import jax
import jax.numpy as jnp
from jax import lax
from jax.experimental import pallas as pl
from jax.experimental.pallas import tpu as pltpu

NEG_SLOPE = 0.2
BN_EPS = 1e-5
L = 11   # sequence length implied by dense1 = Linear(16 * 11, 50)
C = 16   # conv channels
H = 50   # dense hidden width


def _leaky(x):
    return jnp.where(x > 0, x, NEG_SLOPE * x)


def _disc_kernel(x_ref, p16_ref, p50_ref, out_ref):
    """x_ref: (L*B, 1) position-major rows (r = l*B + b), single input channel.

    p16_ref: (57, 16)  packed: [w1 taps (3); b1; g1; be1; b2; g2; be2; w2 im2col (48)]
    p50_ref: (230, 50) packed: [dw1 (176); dw2 (50); db1; db2; dw3; db3 (lane 0)]
    """
    LB = x_ref.shape[0]
    B = LB // L

    # ---- packed parameters (width-16 slab) ----
    w1_m1 = p16_ref[0:1, :]
    w1_c = p16_ref[1:2, :]
    w1_p1 = p16_ref[2:3, :]
    b1 = p16_ref[3:4, :]
    g1 = p16_ref[4:5, :]
    be1 = p16_ref[5:6, :]
    b2 = p16_ref[6:7, :]
    g2 = p16_ref[7:8, :]
    be2 = p16_ref[8:9, :]
    w2 = p16_ref[9:9 + 3 * C, :]                      # (48, 16) im2col weight

    def shift(a, zeros_blk):
        # value at position l-1 / l+1 for every (sample, position) row.
        # Zero blocks ARE the 'same'-padding boundary (l==0 / l==L-1).
        a_m1 = jnp.concatenate([zeros_blk, a[:-B, :]], axis=0)
        a_p1 = jnp.concatenate([a[B:, :], zeros_blk], axis=0)
        return a_m1, a_p1

    def batchnorm(h, gamma, beta):
        # training-mode BatchNorm1d: per-channel stats over (batch, length)
        inv_n = 1.0 / float(h.shape[0])
        mean = jnp.sum(h, axis=0, keepdims=True) * inv_n
        var = jnp.sum((h - mean) ** 2, axis=0, keepdims=True) * inv_n
        return gamma * (h - mean) * lax.rsqrt(var + BN_EPS) + beta

    # ---- conv1 (Cin=1): pure VPU broadcast multiply ----
    x = x_ref[...]                                    # (L*B, 1)
    x_m1, x_p1 = shift(x, jnp.zeros((B, 1), x.dtype))
    h = x_m1 * w1_m1 + x * w1_c + x_p1 * w1_p1 + b1   # (L*B, 16)
    h = batchnorm(_leaky(h), g1, be1)

    # ---- conv2: single im2col matmul (L*B, 48) @ (48, 16) ----
    h_m1, h_p1 = shift(h, jnp.zeros((B, C), h.dtype))
    col = jnp.concatenate([h_m1, h, h_p1], axis=-1)   # (L*B, 48)
    h = jnp.dot(col, w2, preferred_element_type=jnp.float32) + b2
    h = batchnorm(_leaky(h), g2, be2)

    # ---- flatten to (B, L*C): lane-concat the per-position row slabs ----
    flat = jnp.concatenate([h[l * B:(l + 1) * B, :] for l in range(L)], axis=-1)

    # ---- packed parameters (width-50 slab) ----
    dw1 = p50_ref[0:L * C, :]                         # (176, 50)
    dw2 = p50_ref[L * C:L * C + H, :]                 # (50, 50)
    db1 = p50_ref[L * C + H + 0:L * C + H + 1, :]     # (1, 50)
    db2 = p50_ref[L * C + H + 1:L * C + H + 2, :]     # (1, 50)
    dw3 = p50_ref[L * C + H + 2:L * C + H + 3, :]     # (1, 50)
    db3 = p50_ref[L * C + H + 3:L * C + H + 4, 0:1]   # (1, 1)

    # ---- dense stack: two full matmuls + VPU reduction for the 50->1 head ----
    y = _leaky(jnp.dot(flat, dw1, preferred_element_type=jnp.float32) + db1)
    y = _leaky(jnp.dot(y, dw2, preferred_element_type=jnp.float32) + db2)
    out_ref[...] = jnp.sum(y * dw3, axis=-1, keepdims=True) + db3


@jax.jit
def discriminator_pallas(x_rows, p16, p50):
    """x_rows: (L*B, 1) f32, position-major rows (r = l*B + b)."""
    B = x_rows.shape[0] // L
    vmem = pl.BlockSpec(memory_space=pltpu.MemorySpace.VMEM)
    return pl.pallas_call(
        _disc_kernel,
        out_shape=jax.ShapeDtypeStruct((B, 1), jnp.float32),
        in_specs=[vmem, vmem, vmem],
        out_specs=vmem,
        compiler_params=pltpu.CompilerParams(vmem_limit_bytes=32 * 1024 * 1024),
    )(x_rows, p16, p50)


# ----------------------------- parameter plumbing -----------------------------

def init_torch_params(key):
    """Deterministic synthetic parameters in PyTorch layout/shapes."""
    ks = jax.random.split(key, 10)
    w1 = 0.30 * jax.random.normal(ks[0], (C, 1, 3), jnp.float32)      # Conv1d(1,16,3)
    b1 = 0.10 * jax.random.normal(ks[1], (C,), jnp.float32)
    w2 = 0.15 * jax.random.normal(ks[2], (C, C, 3), jnp.float32)      # Conv1d(16,16,3)
    b2 = 0.10 * jax.random.normal(ks[3], (C,), jnp.float32)
    g1 = jnp.ones((C,), jnp.float32); be1 = jnp.zeros((C,), jnp.float32)
    g2 = jnp.ones((C,), jnp.float32); be2 = jnp.zeros((C,), jnp.float32)
    d1w = 0.08 * jax.random.normal(ks[4], (H, C * L), jnp.float32)    # Linear(176,50)
    d1b = 0.05 * jax.random.normal(ks[5], (H,), jnp.float32)
    d2w = 0.15 * jax.random.normal(ks[6], (H, H), jnp.float32)        # Linear(50,50)
    d2b = 0.05 * jax.random.normal(ks[7], (H,), jnp.float32)
    d3w = 0.15 * jax.random.normal(ks[8], (1, H), jnp.float32)        # Linear(50,1)
    d3b = 0.05 * jax.random.normal(ks[9], (1,), jnp.float32)
    return (w1, b1, g1, be1, w2, b2, g2, be2, d1w, d1b, d2w, d2b, d3w, d3b)


def to_kernel_params(tp):
    """Pack the 13 small tensors into two VMEM slabs (3 input DMAs total)."""
    (w1, b1, g1, be1, w2, b2, g2, be2, d1w, d1b, d2w, d2b, d3w, d3b) = tp

    # conv1 taps: (3, 16) with [k, cout] = w1[cout, 0, k]
    w1_taps = jnp.transpose(w1, (2, 1, 0)).reshape(3, C)
    # conv2 im2col weight: (48, 16) with [k*16+cin, cout] = w2[cout, cin, k]
    w2_im2col = jnp.transpose(w2, (2, 1, 0)).reshape(3 * C, C)
    p16 = jnp.concatenate([
        w1_taps,
        b1[None, :], g1[None, :], be1[None, :],
        b2[None, :], g2[None, :], be2[None, :],
        w2_im2col,
    ], axis=0)                                                        # (57, 16)

    # dense1: torch flatten index i = c*L + l  ->  kernel column j = l*16 + c
    dw1 = d1w.T.reshape(C, L, H).transpose(1, 0, 2).reshape(L * C, H)  # (176, 50)
    db3_row = jnp.zeros((1, H), jnp.float32).at[0, 0].set(d3b[0])
    p50 = jnp.concatenate([
        dw1,
        d2w.T,                        # (50, 50) [in, out]
        d1b[None, :], d2b[None, :],
        d3w,                          # (1, 50) final projection row
        db3_row,                      # (1, 50) final bias at lane 0
    ], axis=0)                                                        # (230, 50)
    return p16, p50


def discriminator_ref(x_ncl, tp):
    """Pure-JAX reference mirroring the PyTorch module (training-mode BN)."""
    (w1, b1, g1, be1, w2, b2, g2, be2, d1w, d1b, d2w, d2b, d3w, d3b) = tp
    dn = ('NCH', 'OIH', 'NCH')

    def block(x, w, b, g, be):
        y = lax.conv_general_dilated(x, w, (1,), [(1, 1)], dimension_numbers=dn)
        y = y + b.reshape(1, -1, 1)
        y = jnp.where(y > 0, y, NEG_SLOPE * y)
        mean = jnp.mean(y, axis=(0, 2), keepdims=True)
        var = jnp.mean((y - mean) ** 2, axis=(0, 2), keepdims=True)
        return g.reshape(1, -1, 1) * (y - mean) / jnp.sqrt(var + BN_EPS) \
            + be.reshape(1, -1, 1)

    y = block(x_ncl, w1, b1, g1, be1)
    y = block(y, w2, b2, g2, be2)
    y = y.reshape(y.shape[0], -1)                      # PyTorch NCL flatten
    h = y @ d1w.T + d1b
    h = jnp.where(h > 0, h, NEG_SLOPE * h)
    h = h @ d2w.T + d2b
    h = jnp.where(h > 0, h, NEG_SLOPE * h)
    return h @ d3w.T + d3b


if __name__ == "__main__":
    key = jax.random.PRNGKey(0)
    kx, kp = jax.random.split(key)
    B = 2
    x_ncl = jax.random.normal(kx, (B, 1, L), jnp.float32)    # PyTorch-layout input
    torch_params = init_torch_params(kp)
    p16, p50 = to_kernel_params(torch_params)

    # Kernel layout: position-major rows r = l*B + b, single channel on lanes.
    x_rows = jnp.transpose(x_ncl[:, 0, :], (1, 0)).reshape(L * B, 1)

    out = discriminator_pallas(x_rows, p16, p50)
    out = jax.block_until_ready(out)

    ref = discriminator_ref(x_ncl, torch_params)
    assert out.shape == (B, 1)
    np.testing.assert_allclose(np.asarray(out), np.asarray(ref),
                               rtol=1e-3, atol=1e-3)
    print("KERNEL_OK")
</pallas_src>

<mosaic_0001>
module attributes {stable_mosaic.version = 11 : i64} {
  func.func @_disc_kernel(%arg0: memref<22x1xf32, #tpu.memory_space<vmem>>, %arg1: memref<57x16xf32, #tpu.memory_space<vmem>>, %arg2: memref<230x50xf32, #tpu.memory_space<vmem>>, %arg3: memref<2x1xf32, #tpu.memory_space<vmem>>) attributes {dimension_semantics = [], scalar_prefetch = 0 : i64, scratch_operands = 0 : i64, tpu.core_type = #tpu.core_type<tc>} {
    %c0 = arith.constant 0 : index
    %c0_0 = arith.constant 0 : index
    %0 = vector.load %arg1[%c0, %c0_0] : memref<57x16xf32, #tpu.memory_space<vmem>>, vector<1x16xf32>
    %c1 = arith.constant 1 : index
    %c0_1 = arith.constant 0 : index
    %1 = vector.load %arg1[%c1, %c0_1] : memref<57x16xf32, #tpu.memory_space<vmem>>, vector<1x16xf32>
    %c2 = arith.constant 2 : index
    %c0_2 = arith.constant 0 : index
    %2 = vector.load %arg1[%c2, %c0_2] : memref<57x16xf32, #tpu.memory_space<vmem>>, vector<1x16xf32>
    %c3 = arith.constant 3 : index
    %c0_3 = arith.constant 0 : index
    %3 = vector.load %arg1[%c3, %c0_3] : memref<57x16xf32, #tpu.memory_space<vmem>>, vector<1x16xf32>
    %c4 = arith.constant 4 : index
    %c0_4 = arith.constant 0 : index
    %4 = vector.load %arg1[%c4, %c0_4] : memref<57x16xf32, #tpu.memory_space<vmem>>, vector<1x16xf32>
    %c5 = arith.constant 5 : index
    %c0_5 = arith.constant 0 : index
    %5 = vector.load %arg1[%c5, %c0_5] : memref<57x16xf32, #tpu.memory_space<vmem>>, vector<1x16xf32>
    %c6 = arith.constant 6 : index
    %c0_6 = arith.constant 0 : index
    %6 = vector.load %arg1[%c6, %c0_6] : memref<57x16xf32, #tpu.memory_space<vmem>>, vector<1x16xf32>
    %c7 = arith.constant 7 : index
    %c0_7 = arith.constant 0 : index
    %7 = vector.load %arg1[%c7, %c0_7] : memref<57x16xf32, #tpu.memory_space<vmem>>, vector<1x16xf32>
    %c8 = arith.constant 8 : index
    %c0_8 = arith.constant 0 : index
    %8 = vector.load %arg1[%c8, %c0_8] : memref<57x16xf32, #tpu.memory_space<vmem>>, vector<1x16xf32>
    %c9 = arith.constant 9 : index
    %c0_9 = arith.constant 0 : index
    %9 = vector.load %arg1[%c9, %c0_9] : memref<57x16xf32, #tpu.memory_space<vmem>>, vector<48x16xf32>
    %c0_10 = arith.constant 0 : index
    %c0_11 = arith.constant 0 : index
    %10 = vector.load %arg0[%c0_10, %c0_11] : memref<22x1xf32, #tpu.memory_space<vmem>>, vector<22x1xf32>
    %cst = arith.constant 0.000000e+00 : f32
    %11 = vector.broadcast %cst : f32 to vector<2x1xf32>
    %12 = vector.extract_strided_slice %10 {offsets = [0, 0], sizes = [20, 1], strides = [1, 1]} : vector<22x1xf32> to vector<20x1xf32>
    %13 = tpu.concatenate %11, %12 in 0 : vector<2x1xf32>, vector<20x1xf32> -> vector<22x1xf32>
    %14 = vector.extract_strided_slice %10 {offsets = [2, 0], sizes = [20, 1], strides = [1, 1]} : vector<22x1xf32> to vector<20x1xf32>
    %15 = tpu.concatenate %14, %11 in 0 : vector<20x1xf32>, vector<2x1xf32> -> vector<22x1xf32>
    %16 = vector.broadcast %13 : vector<22x1xf32> to vector<22x16xf32>
    %17 = vector.broadcast %0 : vector<1x16xf32> to vector<22x16xf32>
    %18 = arith.mulf %16, %17 : vector<22x16xf32>
    %19 = vector.broadcast %10 : vector<22x1xf32> to vector<22x16xf32>
    %20 = vector.broadcast %1 : vector<1x16xf32> to vector<22x16xf32>
    %21 = arith.mulf %19, %20 : vector<22x16xf32>
    %22 = arith.addf %18, %21 : vector<22x16xf32>
    %23 = vector.broadcast %15 : vector<22x1xf32> to vector<22x16xf32>
    %24 = vector.broadcast %2 : vector<1x16xf32> to vector<22x16xf32>
    %25 = arith.mulf %23, %24 : vector<22x16xf32>
    %26 = arith.addf %22, %25 : vector<22x16xf32>
    %27 = vector.broadcast %3 : vector<1x16xf32> to vector<22x16xf32>
    %28 = arith.addf %26, %27 : vector<22x16xf32>
    %cst_12 = arith.constant 0.000000e+00 : f32
    %29 = vector.broadcast %cst_12 : f32 to vector<22x16xf32>
    %30 = arith.cmpf ogt, %28, %29 : vector<22x16xf32>
    %cst_13 = arith.constant 2.000000e-01 : f32
    %31 = vector.broadcast %cst_13 : f32 to vector<22x16xf32>
    %32 = arith.mulf %31, %28 : vector<22x16xf32>
    %33 = arith.select %30, %28, %32 : vector<22x16xi1>, vector<22x16xf32>
    %cst_14 = arith.constant dense<0.000000e+00> : vector<16xf32>
    %34 = vector.multi_reduction <add>, %33, %cst_14 [0] : vector<22x16xf32> to vector<16xf32>
    %35 = vector.shape_cast %34 : vector<16xf32> to vector<1x16xf32>
    %cst_15 = arith.constant 0.0454545468 : f32
    %36 = vector.broadcast %cst_15 : f32 to vector<1x16xf32>
    %37 = arith.mulf %35, %36 : vector<1x16xf32>
    %38 = vector.broadcast %37 : vector<1x16xf32> to vector<22x16xf32>
    %39 = arith.subf %33, %38 : vector<22x16xf32>
    %40 = arith.mulf %39, %39 : vector<22x16xf32>
    %cst_16 = arith.constant dense<0.000000e+00> : vector<16xf32>
    %41 = vector.multi_reduction <add>, %40, %cst_16 [0] : vector<22x16xf32> to vector<16xf32>
    %42 = vector.shape_cast %41 : vector<16xf32> to vector<1x16xf32>
    %cst_17 = arith.constant 0.0454545468 : f32
    %43 = vector.broadcast %cst_17 : f32 to vector<1x16xf32>
    %44 = arith.mulf %42, %43 : vector<1x16xf32>
    %45 = vector.broadcast %37 : vector<1x16xf32> to vector<22x16xf32>
    %46 = arith.subf %33, %45 : vector<22x16xf32>
    %47 = vector.broadcast %4 : vector<1x16xf32> to vector<22x16xf32>
    %48 = arith.mulf %47, %46 : vector<22x16xf32>
    %cst_18 = arith.constant 9.99999974E-6 : f32
    %49 = vector.broadcast %cst_18 : f32 to vector<1x16xf32>
    %50 = arith.addf %44, %49 : vector<1x16xf32>
    %51 = math.rsqrt %50 : vector<1x16xf32>
    %52 = vector.broadcast %51 : vector<1x16xf32> to vector<22x16xf32>
    %53 = arith.mulf %48, %52 : vector<22x16xf32>
    %54 = vector.broadcast %5 : vector<1x16xf32> to vector<22x16xf32>
    %55 = arith.addf %53, %54 : vector<22x16xf32>
    %cst_19 = arith.constant 0.000000e+00 : f32
    %56 = vector.broadcast %cst_19 : f32 to vector<2x16xf32>
    %57 = vector.extract_strided_slice %55 {offsets = [0, 0], sizes = [20, 16], strides = [1, 1]} : vector<22x16xf32> to vector<20x16xf32>
    %58 = tpu.concatenate %56, %57 in 0 : vector<2x16xf32>, vector<20x16xf32> -> vector<22x16xf32>
    %59 = vector.extract_strided_slice %55 {offsets = [2, 0], sizes = [20, 16], strides = [1, 1]} : vector<22x16xf32> to vector<20x16xf32>
    %60 = tpu.concatenate %59, %56 in 0 : vector<20x16xf32>, vector<2x16xf32> -> vector<22x16xf32>
    %61 = tpu.concatenate %58, %55, %60 in 1 : vector<22x16xf32>, vector<22x16xf32>, vector<22x16xf32> -> vector<22x48xf32>
    %cst_20 = arith.constant dense<0.000000e+00> : vector<22x16xf32>
    %62 = tpu.matmul %61, %9, %cst_20 {dimension_numbers = #tpu.dot_dimension_numbers<[1], [0], [0], [1], [0, 0, 1, 1], [], []>} : vector<22x48xf32>, vector<48x16xf32>, vector<22x16xf32> -> vector<22x16xf32>
    %63 = vector.broadcast %6 : vector<1x16xf32> to vector<22x16xf32>
    %64 = arith.addf %62, %63 : vector<22x16xf32>
    %cst_21 = arith.constant 0.000000e+00 : f32
    %65 = vector.broadcast %cst_21 : f32 to vector<22x16xf32>
    %66 = arith.cmpf ogt, %64, %65 : vector<22x16xf32>
    %cst_22 = arith.constant 2.000000e-01 : f32
    %67 = vector.broadcast %cst_22 : f32 to vector<22x16xf32>
    %68 = arith.mulf %67, %64 : vector<22x16xf32>
    %69 = arith.select %66, %64, %68 : vector<22x16xi1>, vector<22x16xf32>
    %cst_23 = arith.constant dense<0.000000e+00> : vector<16xf32>
    %70 = vector.multi_reduction <add>, %69, %cst_23 [0] : vector<22x16xf32> to vector<16xf32>
    %71 = vector.shape_cast %70 : vector<16xf32> to vector<1x16xf32>
    %cst_24 = arith.constant 0.0454545468 : f32
    %72 = vector.broadcast %cst_24 : f32 to vector<1x16xf32>
    %73 = arith.mulf %71, %72 : vector<1x16xf32>
    %74 = vector.broadcast %73 : vector<1x16xf32> to vector<22x16xf32>
    %75 = arith.subf %69, %74 : vector<22x16xf32>
    %76 = arith.mulf %75, %75 : vector<22x16xf32>
    %cst_25 = arith.constant dense<0.000000e+00> : vector<16xf32>
    %77 = vector.multi_reduction <add>, %76, %cst_25 [0] : vector<22x16xf32> to vector<16xf32>
    %78 = vector.shape_cast %77 : vector<16xf32> to vector<1x16xf32>
    %cst_26 = arith.constant 0.0454545468 : f32
    %79 = vector.broadcast %cst_26 : f32 to vector<1x16xf32>
    %80 = arith.mulf %78, %79 : vector<1x16xf32>
    %81 = vector.broadcast %73 : vector<1x16xf32> to vector<22x16xf32>
    %82 = arith.subf %69, %81 : vector<22x16xf32>
    %83 = vector.broadcast %7 : vector<1x16xf32> to vector<22x16xf32>
    %84 = arith.mulf %83, %82 : vector<22x16xf32>
    %cst_27 = arith.constant 9.99999974E-6 : f32
    %85 = vector.broadcast %cst_27 : f32 to vector<1x16xf32>
    %86 = arith.addf %80, %85 : vector<1x16xf32>
    %87 = math.rsqrt %86 : vector<1x16xf32>
    %88 = vector.broadcast %87 : vector<1x16xf32> to vector<22x16xf32>
    %89 = arith.mulf %84, %88 : vector<22x16xf32>
    %90 = vector.broadcast %8 : vector<1x16xf32> to vector<22x16xf32>
    %91 = arith.addf %89, %90 : vector<22x16xf32>
    %92 = vector.extract_strided_slice %91 {offsets = [0, 0], sizes = [2, 16], strides = [1, 1]} : vector<22x16xf32> to vector<2x16xf32>
    %93 = vector.extract_strided_slice %91 {offsets = [2, 0], sizes = [2, 16], strides = [1, 1]} : vector<22x16xf32> to vector<2x16xf32>
    %94 = vector.extract_strided_slice %91 {offsets = [4, 0], sizes = [2, 16], strides = [1, 1]} : vector<22x16xf32> to vector<2x16xf32>
    %95 = vector.extract_strided_slice %91 {offsets = [6, 0], sizes = [2, 16], strides = [1, 1]} : vector<22x16xf32> to vector<2x16xf32>
    %96 = vector.extract_strided_slice %91 {offsets = [8, 0], sizes = [2, 16], strides = [1, 1]} : vector<22x16xf32> to vector<2x16xf32>
    %97 = vector.extract_strided_slice %91 {offsets = [10, 0], sizes = [2, 16], strides = [1, 1]} : vector<22x16xf32> to vector<2x16xf32>
    %98 = vector.extract_strided_slice %91 {offsets = [12, 0], sizes = [2, 16], strides = [1, 1]} : vector<22x16xf32> to vector<2x16xf32>
    %99 = vector.extract_strided_slice %91 {offsets = [14, 0], sizes = [2, 16], strides = [1, 1]} : vector<22x16xf32> to vector<2x16xf32>
    %100 = vector.extract_strided_slice %91 {offsets = [16, 0], sizes = [2, 16], strides = [1, 1]} : vector<22x16xf32> to vector<2x16xf32>
    %101 = vector.extract_strided_slice %91 {offsets = [18, 0], sizes = [2, 16], strides = [1, 1]} : vector<22x16xf32> to vector<2x16xf32>
    %102 = vector.extract_strided_slice %91 {offsets = [20, 0], sizes = [2, 16], strides = [1, 1]} : vector<22x16xf32> to vector<2x16xf32>
    %103 = tpu.concatenate %92, %93, %94, %95, %96, %97, %98, %99, %100, %101, %102 in 1 : vector<2x16xf32>, vector<2x16xf32>, vector<2x16xf32>, vector<2x16xf32>, vector<2x16xf32>, vector<2x16xf32>, vector<2x16xf32>, vector<2x16xf32>, vector<2x16xf32>, vector<2x16xf32>, vector<2x16xf32> -> vector<2x176xf32>
    %c0_28 = arith.constant 0 : index
    %c0_29 = arith.constant 0 : index
    %104 = vector.load %arg2[%c0_28, %c0_29] : memref<230x50xf32, #tpu.memory_space<vmem>>, vector<176x50xf32>
    %c176 = arith.constant 176 : index
    %c0_30 = arith.constant 0 : index
    %105 = vector.load %arg2[%c176, %c0_30] : memref<230x50xf32, #tpu.memory_space<vmem>>, vector<50x50xf32>
    %c226 = arith.constant 226 : index
    %c0_31 = arith.constant 0 : index
    %106 = vector.load %arg2[%c226, %c0_31] : memref<230x50xf32, #tpu.memory_space<vmem>>, vector<1x50xf32>
    %c227 = arith.constant 227 : index
    %c0_32 = arith.constant 0 : index
    %107 = vector.load %arg2[%c227, %c0_32] : memref<230x50xf32, #tpu.memory_space<vmem>>, vector<1x50xf32>
    %c228 = arith.constant 228 : index
    %c0_33 = arith.constant 0 : index
    %108 = vector.load %arg2[%c228, %c0_33] : memref<230x50xf32, #tpu.memory_space<vmem>>, vector<1x50xf32>
    %c229 = arith.constant 229 : index
    %c0_34 = arith.constant 0 : index
    %109 = vector.load %arg2[%c229, %c0_34] : memref<230x50xf32, #tpu.memory_space<vmem>>, vector<1x1xf32>
    %cst_35 = arith.constant dense<0.000000e+00> : vector<2x50xf32>
    %110 = tpu.matmul %103, %104, %cst_35 {dimension_numbers = #tpu.dot_dimension_numbers<[1], [0], [0], [1], [0, 0, 1, 1], [], []>} : vector<2x176xf32>, vector<176x50xf32>, vector<2x50xf32> -> vector<2x50xf32>
    %111 = vector.broadcast %106 : vector<1x50xf32> to vector<2x50xf32>
    %112 = arith.addf %110, %111 : vector<2x50xf32>
    %cst_36 = arith.constant 0.000000e+00 : f32
    %113 = vector.broadcast %cst_36 : f32 to vector<2x50xf32>
    %114 = arith.cmpf ogt, %112, %113 : vector<2x50xf32>
    %cst_37 = arith.constant 2.000000e-01 : f32
    %115 = vector.broadcast %cst_37 : f32 to vector<2x50xf32>
    %116 = arith.mulf %115, %112 : vector<2x50xf32>
    %117 = arith.select %114, %112, %116 : vector<2x50xi1>, vector<2x50xf32>
    %cst_38 = arith.constant dense<0.000000e+00> : vector<2x50xf32>
    %118 = tpu.matmul %117, %105, %cst_38 {dimension_numbers = #tpu.dot_dimension_numbers<[1], [0], [0], [1], [0, 0, 1, 1], [], []>} : vector<2x50xf32>, vector<50x50xf32>, vector<2x50xf32> -> vector<2x50xf32>
    %119 = vector.broadcast %107 : vector<1x50xf32> to vector<2x50xf32>
    %120 = arith.addf %118, %119 : vector<2x50xf32>
    %cst_39 = arith.constant 0.000000e+00 : f32
    %121 = vector.broadcast %cst_39 : f32 to vector<2x50xf32>
    %122 = arith.cmpf ogt, %120, %121 : vector<2x50xf32>
    %cst_40 = arith.constant 2.000000e-01 : f32
    %123 = vector.broadcast %cst_40 : f32 to vector<2x50xf32>
    %124 = arith.mulf %123, %120 : vector<2x50xf32>
    %125 = arith.select %122, %120, %124 : vector<2x50xi1>, vector<2x50xf32>
    %126 = vector.broadcast %108 : vector<1x50xf32> to vector<2x50xf32>
    %127 = arith.mulf %125, %126 : vector<2x50xf32>
    %cst_41 = arith.constant dense<0.000000e+00> : vector<2xf32>
    %128 = vector.multi_reduction <add>, %127, %cst_41 [1] : vector<2x50xf32> to vector<2xf32>
    %129 = vector.shape_cast %128 : vector<2xf32> to vector<2x1xf32>
    %130 = vector.broadcast %109 : vector<1x1xf32> to vector<2x1xf32>
    %131 = arith.addf %129, %130 : vector<2x1xf32>
    %c0_42 = arith.constant 0 : index
    %c0_43 = arith.constant 0 : index
    %132 = vector.load %arg3[%c0_42, %c0_43] : memref<2x1xf32, #tpu.memory_space<vmem>>, vector<2x1xf32>
    tpu.vector_store %arg3[%c0_42, %c0_43], %131 {strides = array<i32>} : memref<2x1xf32, #tpu.memory_space<vmem>>, vector<2x1xf32>,
    return
  }
}

</mosaic_0001>

<llo_original>
// kernel: discriminator_pallas.1
$region0: #{discriminator_pallas.1}
  #allocation0 [shape = 'u32[]', space=smem, size = 0x4, offset = 0x4, fixed_abs, tag = 'smem constant byte address 0x4 - core index']
  #allocation1 [shape = 'u32[144,128]{1,0:T(1,128)}', space=vmem, size = 0x12000, scoped, tag = 'internal scratch']
  %s0 = inlined_call_operand.vmem [shape: f32[22,1], index: 0, kind: input, shape index: {}]
  %s1 = inlined_call_operand.vmem [shape: f32[57,16], index: 1, kind: input, shape index: {}]
  %s2 = inlined_call_operand.vmem [shape: f32[230,50], index: 2, kind: input, shape index: {}]
  %s3 = inlined_call_operand.vmem [shape: f32[2,1], index: 3, kind: output, shape index: {}]
  %s4 = sld [smem:[#allocation0]]
  $region22: #{discriminator_pallas.1} parent=0
    _
  %s6 = ssub.s32 1, %s4
  %s7 = scalar_select 0, %s6, %s4
  // Predicated region
  $region2: #{discriminator_pallas.1} parent=0 // pred_check
    _
  $region3: #{discriminator_pallas.1} parent=0 // pred_check_branch
    %9 = sbr.rel (0) target = $region5
  $region4: #{discriminator_pallas.1} parent=0 // pred_region
    _
  $region5: #{discriminator_pallas.1} parent=0 // pred_fallthru
    _
  // Predicated region
  $region6: #{discriminator_pallas.1} parent=0 // pred_check
    _
  $region7: #{discriminator_pallas.1} parent=0 // pred_check_branch
    %11 = sbr.rel (0) target = $region9
  $region8: #{discriminator_pallas.1} parent=0 // pred_region
    _
  $region9: #{discriminator_pallas.1} parent=0 // pred_fallthru
    _
  // Predicated region
  $region10: #{discriminator_pallas.1} parent=0 // pred_check
    _
  $region11: #{discriminator_pallas.1} parent=0 // pred_check_branch
    %13 = sbr.rel (0) target = $region13
  $region12: #{discriminator_pallas.1} parent=0 // pred_region
    _
  $region13: #{discriminator_pallas.1} parent=0 // pred_fallthru
    _
  %v14 = vld [vmem:[%s1] sm:$0x1]
  %v15 = vld [vmem:[%s1 + $0x1] sm:$0x1]
  %v16 = vld [vmem:[%s1 + $0x2] sm:$0x1]
  %v17 = vld [vmem:[%s1 + $0x3] sm:$0x1]
  %v18 = vld [vmem:[%s1 + $0x4] sm:$0x1]
  %v19 = vld [vmem:[%s1 + $0x5] sm:$0x1]
  %v20 = vld [vmem:[%s1 + $0x6] sm:$0x1]
  %v21 = vld [vmem:[%s1 + $0x7] sm:$0x1]
  %v22 = vld [vmem:[%s1 + $0x8] sm:$0x1]
  %v23 = vld [vmem:[%s1 + $0x9] sm:$0xff]
  %v24 = vld [vmem:[%s1 + $0x11] sm:$0xff]
  %v25 = vld [vmem:[%s1 + $0x19] sm:$0xff]
  %v26 = vld [vmem:[%s1 + $0x21] sm:$0xff]
  %v27 = vld [vmem:[%s1 + $0x29] sm:$0xff]
  %v28 = vld [vmem:[%s1 + $0x31] sm:$0xff]
  %v29 = vld [vmem:[%s0] sm:$0xff]
  %v30 = vld [vmem:[%s0 + $0x8] sm:$0xff]
  %v31 = vld [vmem:[%s0 + $0x10] sm:$0x3f]
  %vm35 = vcmask 1041408
  %v36 = vrot.slane %v29, 6
  %v37 = vrot.slane %v30, 6
  %v38 = vsel %vm35, %v36, %v37
  %v39 = vrot.slane %v31, 6
  %v40 = vsel %vm35, %v37, %v39
  %v42 = vsel %vm35, 0.0, %v36
  %vm43 = vcmask 1045504
  %v44 = vrot.slane %v29, 2
  %v45 = vrot.slane %v30, 2
  %v46 = vsel %vm43, %v44, %v45
  %v47 = vrot.slane %v31, 2
  %v48 = vsel %vm43, %v45, %v47
  %vm50 = vcmask 1043456
  %v51 = vsel %vm50, %v47, 0.0
  %53 = vset.pattern.permute.xlu0 0
  %54 = vperm.xlu0 %53, %v42
  %v55 = vpop.permute.xlu0 %54
  %57 = vset.pattern.permute.xlu0 0
  %58 = vperm.xlu0 %57, %v38
  %v59 = vpop.permute.xlu0 %58
  %61 = vset.pattern.permute.xlu0 0
  %62 = vperm.xlu0 %61, %v40
  %v63 = vpop.permute.xlu0 %62
  %v65 = vlaneseq
  %v66 = vshrl.u32 %v65, 7
  %v67 = vsub.s32 0, %v66
  %v68 = vrot.slane %v14, %v67
  %v69 = vmul.f32 %v55, %v68
  %v70 = vmul.f32 %v59, %v68
  %v71 = vmul.f32 %v63, %v68
  %72 = vset.pattern.permute.xlu0 0
  %73 = vperm.xlu0 %72, %v29
  %v74 = vpop.permute.xlu0 %73
  %76 = vset.pattern.permute.xlu0 0
  %77 = vperm.xlu0 %76, %v30
  %v78 = vpop.permute.xlu0 %77
  %80 = vset.pattern.permute.xlu0 0
  %81 = vperm.xlu0 %80, %v31
  %v82 = vpop.permute.xlu0 %81
  %v84 = vlaneseq
  %v85 = vshrl.u32 %v84, 7
  %v86 = vsub.s32 0, %v85
  %v87 = vrot.slane %v15, %v86
  %v88 = vmul.f32 %v74, %v87
  %v89 = vmul.f32 %v78, %v87
  %v90 = vmul.f32 %v82, %v87
  %v91 = vadd.f32 %v69, %v88
  %v92 = vadd.f32 %v70, %v89
  %v93 = vadd.f32 %v71, %v90
  %94 = vset.pattern.permute.xlu0 0
  %95 = vperm.xlu0 %94, %v46
  %v96 = vpop.permute.xlu0 %95
  %98 = vset.pattern.permute.xlu0 0
  %99 = vperm.xlu0 %98, %v48
  %v100 = vpop.permute.xlu0 %99
  %103 = vset.pattern.permute.xlu0 0
  %104 = vperm.xlu0 %103, %v51
  %v105 = vpop.permute.xlu0 %104
  %v107 = vlaneseq
  %v108 = vshrl.u32 %v107, 7
  %v109 = vsub.s32 0, %v108
  %v110 = vrot.slane %v16, %v109
  %v111 = vmul.f32 %v96, %v110
  %v112 = vmul.f32 %v100, %v110
  %v113 = vmul.f32 %v105, %v110
  %v114 = vadd.f32 %v91, %v111
  %v115 = vadd.f32 %v92, %v112
  %v116 = vadd.f32 %v93, %v113
  %v117 = vlaneseq
  %v118 = vshrl.u32 %v117, 7
  %v119 = vsub.s32 0, %v118
  %v120 = vrot.slane %v17, %v119
  %v121 = vadd.f32 %v114, %v120
  %v122 = vadd.f32 %v115, %v120
  %v123 = vadd.f32 %v116, %v120
  %vm124 = vcmp.gt.f32.partialorder %v121, 0.0
  %vm125 = vcmp.gt.f32.partialorder %v122, 0.0
  %vm126 = vcmp.gt.f32.partialorder %v123, 0.0
  %v127 = vmul.f32 %v121, 0.2
  %v128 = vmul.f32 %v122, 0.2
  %v129 = vmul.f32 %v123, 0.2
  %v130 = vsel %vm124, %v121, %v127
  %v131 = vsel %vm125, %v122, %v128
  %v132 = vsel %vm126, %v123, %v129
  %vm133 = vcmask 130048
  %v134 = vsel %vm133, %v130, 0.0
  %v135 = vsel %vm133, %v131, 0.0
  %v136 = vadd.f32 %v134, %v135
  %vm137 = vcmask 128000
  %v138 = vsel %vm137, %v132, 0.0
  %v139 = vadd.f32 %v136, %v138
  %v140 = vrot.slane %v139, 4
  %v141 = vadd.f32 %v139, %v140
  %v142 = vrot.slane %v141, 2
  %v143 = vadd.f32 %v141, %v142
  %v144 = vrot.slane %v143, 1
  %v145 = vadd.f32 %v143, %v144
  %v146 = vmul.f32 %v145, 0.045454547
  %v147 = vsub.f32 %v130, %v146
  %v148 = vsub.f32 %v131, %v146
  %v149 = vsub.f32 %v132, %v146
  %v150 = vmul.f32 %v147, %v147
  %v151 = vmul.f32 %v148, %v148
  %v152 = vmul.f32 %v149, %v149
  %v153 = vsel %vm133, %v150, 0.0
  %v154 = vsel %vm133, %v151, 0.0
  %v155 = vadd.f32 %v153, %v154
  %v156 = vsel %vm137, %v152, 0.0
  %v157 = vadd.f32 %v155, %v156
  %v158 = vrot.slane %v157, 4
  %v159 = vadd.f32 %v157, %v158
  %v160 = vrot.slane %v159, 2
  %v161 = vadd.f32 %v159, %v160
  %v162 = vrot.slane %v161, 1
  %v163 = vadd.f32 %v161, %v162
  %v164 = vmul.f32 %v163, 0.045454547
  %v165 = vlaneseq
  %v166 = vshrl.u32 %v165, 7
  %v167 = vsub.s32 0, %v166
  %v168 = vrot.slane %v18, %v167
  %v169 = vmul.f32 %v168, %v147
  %v170 = vmul.f32 %v168, %v148
  %v171 = vmul.f32 %v168, %v149
  %v172 = vadd.f32 %v164, 1e-05
  %v173 = vrsqrt.pop %v172
  %v174 = vmul.f32 %v169, %v173
  %v175 = vmul.f32 %v170, %v173
  %v176 = vmul.f32 %v171, %v173
  %v177 = vlaneseq
  %v178 = vshrl.u32 %v177, 7
  %v179 = vsub.s32 0, %v178
  %v180 = vrot.slane %v19, %v179
  %v181 = vadd.f32 %v174, %v180
  %v182 = vadd.f32 %v175, %v180
  %v183 = vadd.f32 %v176, %v180
  %v187 = vrot.slane %v181, 6
  %v188 = vrot.slane %v182, 6
  %v189 = vsel %vm35, %v187, %v188
  %v190 = vrot.slane %v183, 6
  %v191 = vsel %vm35, %v188, %v190
  %v195 = vsel %vm35, 0.0, %v187
  %v196 = vrot.slane %v181, 2
  %v197 = vrot.slane %v182, 2
  %v198 = vsel %vm43, %v196, %v197
  %v199 = vrot.slane %v183, 2
  %v200 = vsel %vm43, %v197, %v199
  %v202 = vsel %vm50, %v199, 0.0
  %203 = vrot.lane.b32.xlu0 %v181, 16
  %v204 = vpop.permute.xlu0 %203
  %205 = vrot.lane.b32.xlu0 %v182, 16
  %v206 = vpop.permute.xlu0 %205
  %207 = vrot.lane.b32.xlu0 %v183, 16
  %v208 = vpop.permute.xlu0 %207
  %213 = vrot.lane.b32.xlu0 %v198, 32
  %v214 = vpop.permute.xlu0 %213
  %215 = vrot.lane.b32.xlu0 %v200, 32
  %v216 = vpop.permute.xlu0 %215
  %217 = vrot.lane.b32.xlu0 %v202, 32
  %v218 = vpop.permute.xlu0 %217
  %v222 = vsel %vm133, %v195, %v204
  %v223 = vsel %vm133, %v189, %v206
  %v224 = vsel %vm133, %v191, %v208
  %vm225 = vcmask 261120
  %v226 = vsel %vm225, %v222, %v214
  %v227 = vsel %vm225, %v223, %v216
  %v228 = vsel %vm225, %v224, %v218
  %v229 = vlaneseq
  %v230 = vshrl.u32 %v229, 7
  %v231 = vsub.s32 0, %v230
  %v232 = vrot.slane %v20, %v231
  %vm233 = vcmask 392192
  %v235 = vsel %vm233, %v226, 0
  %v238 = vsel %vm233, %v227, 0
  %v241 = vsel %vm233, %v228, 0
  %243 = vmatprep.subr.mxu0 0.0
  %244 = vmatpush1.msra.mxu0 0.0
  %245 = vmatprep.subr.mxu0 0.0
  %246 = vmatpush1.msra.mxu0 0.0
  %247 = vmatprep.subr.mxu0 0.0
  %248 = vmatpush1.msra.mxu0 0.0
  %249 = vmatprep.subr.mxu0 0.0
  %250 = vmatpush1.msra.mxu0 0.0
  %251 = vmatprep.subr.mxu0 0.0
  %252 = vmatpush1.msra.mxu0 0.0
  %253 = vmatprep.subr.mxu0 0.0
  %254 = vmatpush1.msra.mxu0 0.0
  %255 = vmatprep.subr.mxu0 0.0
  %256 = vmatpush1.msra.mxu0 0.0
  %257 = vmatprep.subr.mxu0 0.0
  %258 = vmatpush1.msra.mxu0 0.0
  %259 = vmatprep.subr.mxu0 0.0
  %260 = vmatpush1.msra.mxu0 0.0
  %261 = vmatprep.subr.mxu0 0.0
  %262 = vmatpush1.msra.mxu0 0.0
  %263 = vmatprep.subr.mxu0 0.0
  %264 = vmatpush1.msra.mxu0 %v28
  %265 = vmatprep.subr.mxu0 0.0
  %266 = vmatpush1.msra.mxu0 %v27
  %267 = vmatprep.subr.mxu0 0.0
  %268 = vmatpush1.msra.mxu0 %v26
  %269 = vmatprep.subr.mxu0 0.0
  %270 = vmatpush1.msra.mxu0 %v25
  %271 = vmatprep.subr.mxu0 0.0
  %272 = vmatpush1.msra.mxu0 %v24
  %273 = vmatprep.subr.mxu0 0.0
  %274 = vmatpush1.msra.mxu0 %v23
  %275 = vmatprep.subr.mxu0 0.0
  %276 = vmatpush2.msra.mxu0 0.0
  %277 = vmatprep.subr.mxu0 0.0
  %278 = vmatpush2.msra.mxu0 0.0
  %279 = vmatprep.subr.mxu0 0.0
  %280 = vmatpush2.msra.mxu0 0.0
  %281 = vmatprep.subr.mxu0 0.0
  %282 = vmatpush2.msra.mxu0 0.0
  %283 = vmatprep.subr.mxu0 0.0
  %284 = vmatpush2.msra.mxu0 0.0
  %285 = vmatprep.subr.mxu0 0.0
  %286 = vmatpush2.msra.mxu0 0.0
  %287 = vmatprep.subr.mxu0 0.0
  %288 = vmatpush2.msra.mxu0 0.0
  %289 = vmatprep.subr.mxu0 0.0
  %290 = vmatpush2.msra.mxu0 0.0
  %291 = vmatprep.subr.mxu0 0.0
  %292 = vmatpush2.msra.mxu0 0.0
  %293 = vmatprep.subr.mxu0 0.0
  %294 = vmatpush2.msra.mxu0 0.0
  %295 = vmatprep.subr.mxu0 0.0
  %296 = vmatpush2.msra.mxu0 0.0
  %297 = vmatprep.subr.mxu0 0.0
  %298 = vmatpush2.msra.mxu0 0.0
  %299 = vmatprep.subr.mxu0 0.0
  %300 = vmatpush2.msra.mxu0 0.0
  %301 = vmatprep.subr.mxu0 0.0
  %302 = vmatpush2.msra.mxu0 0.0
  %303 = vmatprep.subr.mxu0 0.0
  %304 = vmatpush2.msra.mxu0 0.0
  %305 = vmatprep.subr.mxu0 0.0
  %306 = vmatpush2.msra.mxu0 0.0
  %307 = vmatprep.mubr.f32.mxu0 0.0
  %308 = vmatmul.mubr.f32.gmra.mxu0 %v235
  %v309 = vpop.f32.mrf.mxu0
  %v310 = vadd.f32 %v232, %v309
  %v311 = vpop.f32.mrf.mxu0
  %312 = vmatprep.mubr.f32.mxu0 0.0
  %313 = vmatmul.mubr.f32.gmra.mxu0 %v238
  %v314 = vpop.f32.mrf.mxu0
  %v315 = vadd.f32 %v232, %v314
  %v316 = vpop.f32.mrf.mxu0
  %317 = vmatprep.mubr.f32.mxu0 0.0
  %318 = vmatmul.mubr.f32.gmra.mxu0 %v241
  %v319 = vpop.f32.mrf.mxu0
  %v320 = vadd.f32 %v232, %v319
  %v321 = vpop.f32.mrf.mxu0
  %322 = vdwg.mxu0
  %vm323 = vcmp.gt.f32.partialorder %v310, 0.0
  %vm324 = vcmp.gt.f32.partialorder %v315, 0.0
  %vm325 = vcmp.gt.f32.partialorder %v320, 0.0
  %v326 = vmul.f32 %v310, 0.2
  %v327 = vmul.f32 %v315, 0.2
  %v328 = vmul.f32 %v320, 0.2
  %v329 = vsel %vm323, %v310, %v326
  %v330 = vsel %vm324, %v315, %v327
  %v331 = vsel %vm325, %v320, %v328
  %v332 = vsel %vm133, %v329, 0.0
  %v333 = vsel %vm133, %v330, 0.0
  %v334 = vadd.f32 %v332, %v333
  %v335 = vsel %vm137, %v331, 0.0
  %v336 = vadd.f32 %v334, %v335
  %v337 = vrot.slane %v336, 4
  %v338 = vadd.f32 %v336, %v337
  %v339 = vrot.slane %v338, 2
  %v340 = vadd.f32 %v338, %v339
  %v341 = vrot.slane %v340, 1
  %v342 = vadd.f32 %v340, %v341
  %v343 = vmul.f32 %v342, 0.045454547
  %v344 = vsub.f32 %v329, %v343
  %v345 = vsub.f32 %v330, %v343
  %v346 = vsub.f32 %v331, %v343
  %v347 = vmul.f32 %v344, %v344
  %v348 = vmul.f32 %v345, %v345
  %v349 = vmul.f32 %v346, %v346
  %v350 = vsel %vm133, %v347, 0.0
  %v351 = vsel %vm133, %v348, 0.0
  %v352 = vadd.f32 %v350, %v351
  %v353 = vsel %vm137, %v349, 0.0
  %v354 = vadd.f32 %v352, %v353
  %v355 = vrot.slane %v354, 4
  %v356 = vadd.f32 %v354, %v355
  %v357 = vrot.slane %v356, 2
  %v358 = vadd.f32 %v356, %v357
  %v359 = vrot.slane %v358, 1
  %v360 = vadd.f32 %v358, %v359
  %v361 = vmul.f32 %v360, 0.045454547
  %v362 = vlaneseq
  %v363 = vshrl.u32 %v362, 7
  %v364 = vsub.s32 0, %v363
  %v365 = vrot.slane %v21, %v364
  %v366 = vmul.f32 %v365, %v344
  %v367 = vmul.f32 %v365, %v345
  %v368 = vmul.f32 %v365, %v346
  %v369 = vadd.f32 %v361, 1e-05
  %v370 = vrsqrt.pop %v369
  %v371 = vmul.f32 %v366, %v370
  %v372 = vmul.f32 %v367, %v370
  %v373 = vmul.f32 %v368, %v370
  %v374 = vlaneseq
  %v375 = vshrl.u32 %v374, 7
  %v376 = vsub.s32 0, %v375
  %v377 = vrot.slane %v22, %v376
  %v378 = vadd.f32 %v371, %v377
  %v379 = vadd.f32 %v372, %v377
  %v380 = vadd.f32 %v373, %v377
  %v382 = vrot.slane %v378, 2
  %383 = vrot.lane.b32.xlu0 %v382, 16
  %v384 = vpop.permute.xlu0 %383
  %v386 = vrot.slane %v378, 4
  %387 = vrot.lane.b32.xlu0 %v386, 32
  %v388 = vpop.permute.xlu0 %387
  %v390 = vrot.slane %v378, 6
  %391 = vrot.lane.b32.xlu0 %v390, 48
  %v392 = vpop.permute.xlu0 %391
  %395 = vrot.lane.b32.xlu0 %v379, 64
  %v396 = vpop.permute.xlu0 %395
  %v398 = vrot.slane %v379, 2
  %399 = vrot.lane.b32.xlu0 %v398, 80
  %v400 = vpop.permute.xlu0 %399
  %v402 = vrot.slane %v379, 4
  %403 = vrot.lane.b32.xlu0 %v402, 96
  %v404 = vpop.permute.xlu0 %403
  %v406 = vrot.slane %v379, 6
  %407 = vrot.lane.b32.xlu0 %v406, 112
  %v408 = vpop.permute.xlu0 %407
  %v411 = vrot.slane %v380, 2
  %412 = vrot.lane.b32.xlu0 %v411, 16
  %v413 = vpop.permute.xlu0 %412
  %v415 = vrot.slane %v380, 4
  %416 = vrot.lane.b32.xlu0 %v415, 32
  %v417 = vpop.permute.xlu0 %416
  %v419 = vsel %vm133, %v378, %v384
  %v420 = vsel %vm225, %v419, %v388
  %v421 = vsel %vm233, %v420, %v392
  %vm422 = vcmask 523264
  %v423 = vsel %vm422, %v421, %v396
  %vm424 = vcmask 654336
  %v425 = vsel %vm424, %v423, %v400
  %vm426 = vcmask 785408
  %v427 = vsel %vm426, %v425, %v404
  %vm428 = vcmask 916480
  %v429 = vsel %vm428, %v427, %v408
  %v430 = vsel %vm133, %v380, %v413
  %v431 = vsel %vm225, %v430, %v417
  %v432 = vld [vmem:[%s2] sm:$0xff]
  %v433 = vld [vmem:[%s2 + $0x8] sm:$0xff]
  %v434 = vld [vmem:[%s2 + $0x10] sm:$0xff]
  %v435 = vld [vmem:[%s2 + $0x18] sm:$0xff]
  %v436 = vld [vmem:[%s2 + $0x20] sm:$0xff]
  %v437 = vld [vmem:[%s2 + $0x28] sm:$0xff]
  %v438 = vld [vmem:[%s2 + $0x30] sm:$0xff]
  %v439 = vld [vmem:[%s2 + $0x38] sm:$0xff]
  %v440 = vld [vmem:[%s2 + $0x40] sm:$0xff]
  %v441 = vld [vmem:[%s2 + $0x48] sm:$0xff]
  %v442 = vld [vmem:[%s2 + $0x50] sm:$0xff]
  %v443 = vld [vmem:[%s2 + $0x58] sm:$0xff]
  %v444 = vld [vmem:[%s2 + $0x60] sm:$0xff]
  %v445 = vld [vmem:[%s2 + $0x68] sm:$0xff]
  %v446 = vld [vmem:[%s2 + $0x70] sm:$0xff]
  %v447 = vld [vmem:[%s2 + $0x78] sm:$0xff]
  %v448 = vld [vmem:[%s2 + $0x80] sm:$0xff]
  %v449 = vld [vmem:[%s2 + $0x88] sm:$0xff]
  %v450 = vld [vmem:[%s2 + $0x90] sm:$0xff]
  %v451 = vld [vmem:[%s2 + $0x98] sm:$0xff]
  %v452 = vld [vmem:[%s2 + $0xa0] sm:$0xff]
  %v453 = vld [vmem:[%s2 + $0xa8] sm:$0xff]
  %v454 = vld [vmem:[%s2 + $0xb0] sm:$0xff]
  %v455 = vld [vmem:[%s2 + $0xb8] sm:$0xff]
  %v456 = vld [vmem:[%s2 + $0xc0] sm:$0xff]
  %v457 = vld [vmem:[%s2 + $0xc8] sm:$0xff]
  %v458 = vld [vmem:[%s2 + $0xd0] sm:$0xff]
  %v459 = vld [vmem:[%s2 + $0xd8] sm:$0xff]
  %v460 = vld [vmem:[%s2 + $0xe0] sm:$0x3]
  %v461 = vld [vmem:[%s2 + $0xe2] sm:$0x1]
  %v462 = vld [vmem:[%s2 + $0xe3] sm:$0x1]
  %v463 = vld [vmem:[%s2 + $0xe4] sm:$0x1]
  %v464 = vld [vmem:[%s2 + $0xe5] sm:$0x1]
  %v465 = vlaneseq
  %v466 = vshrl.u32 %v465, 7
  %v467 = vsub.s32 0, %v466
  %v468 = vrot.slane %v461, %v467
  %v470 = vsel %vm233, %v431, 0
  %472 = vmatprep.subr.mxu0 0.0
  %473 = vmatpush1.msra.mxu0 %v447
  %474 = vmatprep.subr.mxu0 0.0
  %475 = vmatpush1.msra.mxu0 %v446
  %476 = vmatprep.subr.mxu0 0.0
  %477 = vmatpush1.msra.mxu0 %v445
  %478 = vmatprep.subr.mxu0 0.0
  %479 = vmatpush1.msra.mxu0 %v444
  %480 = vmatprep.subr.mxu0 0.0
  %481 = vmatpush1.msra.mxu0 %v443
  %482 = vmatprep.subr.mxu0 0.0
  %483 = vmatpush1.msra.mxu0 %v442
  %484 = vmatprep.subr.mxu0 0.0
  %485 = vmatpush1.msra.mxu0 %v441
  %486 = vmatprep.subr.mxu0 0.0
  %487 = vmatpush1.msra.mxu0 %v440
  %488 = vmatprep.subr.mxu0 0.0
  %489 = vmatpush1.msra.mxu0 %v439
  %490 = vmatprep.subr.mxu0 0.0
  %491 = vmatpush1.msra.mxu0 %v438
  %492 = vmatprep.subr.mxu0 0.0
  %493 = vmatpush1.msra.mxu0 %v437
  %494 = vmatprep.subr.mxu0 0.0
  %495 = vmatpush1.msra.mxu0 %v436
  %496 = vmatprep.subr.mxu0 0.0
  %497 = vmatpush1.msra.mxu0 %v435
  %498 = vmatprep.subr.mxu0 0.0
  %499 = vmatpush1.msra.mxu0 %v434
  %500 = vmatprep.subr.mxu0 0.0
  %501 = vmatpush1.msra.mxu0 %v433
  %502 = vmatprep.subr.mxu0 0.0
  %503 = vmatpush1.msra.mxu0 %v432
  %504 = vmatprep.subr.mxu0 0.0
  %505 = vmatpush2.msra.mxu0 0.0
  %506 = vmatprep.subr.mxu0 0.0
  %507 = vmatpush2.msra.mxu0 0.0
  %508 = vmatprep.subr.mxu0 0.0
  %509 = vmatpush2.msra.mxu0 0.0
  %510 = vmatprep.subr.mxu0 0.0
  %511 = vmatpush2.msra.mxu0 0.0
  %512 = vmatprep.subr.mxu0 0.0
  %513 = vmatpush2.msra.mxu0 0.0
  %514 = vmatprep.subr.mxu0 0.0
  %515 = vmatpush2.msra.mxu0 0.0
  %516 = vmatprep.subr.mxu0 0.0
  %517 = vmatpush2.msra.mxu0 0.0
  %518 = vmatprep.subr.mxu0 0.0
  %519 = vmatpush2.msra.mxu0 0.0
  %520 = vmatprep.subr.mxu0 0.0
  %521 = vmatpush2.msra.mxu0 0.0
  %522 = vmatprep.subr.mxu0 0.0
  %523 = vmatpush2.msra.mxu0 0.0
  %524 = vmatprep.subr.mxu0 0.0
  %525 = vmatpush2.msra.mxu0 %v453
  %526 = vmatprep.subr.mxu0 0.0
  %527 = vmatpush2.msra.mxu0 %v452
  %528 = vmatprep.subr.mxu0 0.0
  %529 = vmatpush2.msra.mxu0 %v451
  %530 = vmatprep.subr.mxu0 0.0
  %531 = vmatpush2.msra.mxu0 %v450
  %532 = vmatprep.subr.mxu0 0.0
  %533 = vmatpush2.msra.mxu0 %v449
  %534 = vmatprep.subr.mxu0 0.0
  %535 = vmatpush2.msra.mxu0 %v448
  %536 = vmatprep.mubr.f32.mxu0 %v470
  %537 = vmatmul.mubr.f32.gmra.mxu0 %v429
  %v538 = vpop.f32.mrf.mxu0
  %v539 = vadd.f32 %v468, %v538
  %v540 = vpop.f32.mrf.mxu0
  %541 = vdwg.mxu0
  %vm542 = vcmp.gt.f32.partialorder %v539, 0.0
  %v543 = vmul.f32 %v539, 0.2
  %v544 = vsel %vm542, %v539, %v543
  %v545 = vlaneseq
  %v546 = vshrl.u32 %v545, 7
  %v547 = vsub.s32 0, %v546
  %v548 = vrot.slane %v462, %v547
  %vm549 = vcmask 408576
  %v551 = vsel %vm549, %v544, 0
  %v554 = vsel %vm35, %v460, 0
  %556 = vmatprep.subr.mxu0 0.0
  %557 = vmatpush1.msra.mxu0 0.0
  %558 = vmatprep.subr.mxu0 0.0
  %559 = vmatpush1.msra.mxu0 0.0
  %560 = vmatprep.subr.mxu0 0.0
  %561 = vmatpush1.msra.mxu0 0.0
  %562 = vmatprep.subr.mxu0 0.0
  %563 = vmatpush1.msra.mxu0 0.0
  %564 = vmatprep.subr.mxu0 0.0
  %565 = vmatpush1.msra.mxu0 0.0
  %566 = vmatprep.subr.mxu0 0.0
  %567 = vmatpush1.msra.mxu0 0.0
  %568 = vmatprep.subr.mxu0 0.0
  %569 = vmatpush1.msra.mxu0 0.0
  %570 = vmatprep.subr.mxu0 0.0
  %571 = vmatpush1.msra.mxu0 0.0
  %572 = vmatprep.subr.mxu0 0.0
  %573 = vmatpush1.msra.mxu0 0.0
  %574 = vmatprep.subr.mxu0 0.0
  %575 = vmatpush1.msra.mxu0 %v554
  %576 = vmatprep.subr.mxu0 0.0
  %577 = vmatpush1.msra.mxu0 %v459
  %578 = vmatprep.subr.mxu0 0.0
  %579 = vmatpush1.msra.mxu0 %v458
  %580 = vmatprep.subr.mxu0 0.0
  %581 = vmatpush1.msra.mxu0 %v457
  %582 = vmatprep.subr.mxu0 0.0
  %583 = vmatpush1.msra.mxu0 %v456
  %584 = vmatprep.subr.mxu0 0.0
  %585 = vmatpush1.msra.mxu0 %v455
  %586 = vmatprep.subr.mxu0 0.0
  %587 = vmatpush1.msra.mxu0 %v454
  %588 = vmatprep.subr.mxu0 0.0
  %589 = vmatpush2.msra.mxu0 0.0
  %590 = vmatprep.subr.mxu0 0.0
  %591 = vmatpush2.msra.mxu0 0.0
  %592 = vmatprep.subr.mxu0 0.0
  %593 = vmatpush2.msra.mxu0 0.0
  %594 = vmatprep.subr.mxu0 0.0
  %595 = vmatpush2.msra.mxu0 0.0
  %596 = vmatprep.subr.mxu0 0.0
  %597 = vmatpush2.msra.mxu0 0.0
  %598 = vmatprep.subr.mxu0 0.0
  %599 = vmatpush2.msra.mxu0 0.0
  %600 = vmatprep.subr.mxu0 0.0
  %601 = vmatpush2.msra.mxu0 0.0
  %602 = vmatprep.subr.mxu0 0.0
  %603 = vmatpush2.msra.mxu0 0.0
  %604 = vmatprep.subr.mxu0 0.0
  %605 = vmatpush2.msra.mxu0 0.0
  %606 = vmatprep.subr.mxu0 0.0
  %607 = vmatpush2.msra.mxu0 0.0
  %608 = vmatprep.subr.mxu0 0.0
  %609 = vmatpush2.msra.mxu0 0.0
  %610 = vmatprep.subr.mxu0 0.0
  %611 = vmatpush2.msra.mxu0 0.0
  %612 = vmatprep.subr.mxu0 0.0
  %613 = vmatpush2.msra.mxu0 0.0
  %614 = vmatprep.subr.mxu0 0.0
  %615 = vmatpush2.msra.mxu0 0.0
  %616 = vmatprep.subr.mxu0 0.0
  %617 = vmatpush2.msra.mxu0 0.0
  %618 = vmatprep.subr.mxu0 0.0
  %619 = vmatpush2.msra.mxu0 0.0
  %620 = vmatprep.mubr.f32.mxu0 0.0
  %621 = vmatmul.mubr.f32.gmra.mxu0 %v551
  %v622 = vpop.f32.mrf.mxu0
  %v623 = vadd.f32 %v548, %v622
  %v624 = vpop.f32.mrf.mxu0
  %625 = vdwg.mxu0
  %vm626 = vcmp.gt.f32.partialorder %v623, 0.0
  %v627 = vmul.f32 %v623, 0.2
  %v628 = vsel %vm626, %v623, %v627
  %v629 = vlaneseq
  %v630 = vshrl.u32 %v629, 7
  %v631 = vsub.s32 0, %v630
  %v632 = vrot.slane %v463, %v631
  %v633 = vmul.f32 %v628, %v632
  %vm634 = vcmask 402432
  %v635 = vsel %vm634, %v633, 0.0
  %636 = vadd.xlane.f32.xlu0 %v635
  %v637 = vpop.xlane.xlu0 %636
  %v638 = vlaneseq
  %v639 = vshrl.u32 %v638, 7
  %v640 = vsub.s32 0, %v639
  %v641 = vrot.slane %v464, %v640
  %v642 = vadd.f32 %v637, %v641
  %vm643 = vcmask 1024
  %644 = vst.msk [vmem:[%s3] sm:$0x3] %vm643, %v642
  // Predicated region
  $region14: #{discriminator_pallas.1} parent=0 // pred_check
    _
  $region15: #{discriminator_pallas.1} parent=0 // pred_check_branch
    %646 = sbr.rel (0) target = $region17
  $region16: #{discriminator_pallas.1} parent=0 // pred_region
    _
  $region17: #{discriminator_pallas.1} parent=0 // pred_fallthru
    _
  // Predicated region
  $region18: #{discriminator_pallas.1} parent=0 // pred_check
    _
  $region19: #{discriminator_pallas.1} parent=0 // pred_check_branch
    %648 = sbr.rel (0) target = $region21
  $region20: #{discriminator_pallas.1} parent=0 // pred_region
    _
  $region21: #{discriminator_pallas.1} parent=0 // pred_fallthru
    _

</llo_original>
